<compile_context>
chip_gen: v7x
topology: tpu7x:2x2x1
jax: 0.10.0
libtpu: 0.0.40
codegen_flags: <defaults>
</compile_context>

<pallas_src>
import functools

import jax
import jax.numpy as jnp
from jax.experimental import pallas as pl
from jax.experimental.pallas import tpu as pltpu

_LANES = 128


def _bce_dice_partial_kernel(x_ref, y_ref, out_ref, *, pos_weight):
    t = pl.program_id(1)

    @pl.when(t == 0)
    def _init():
        out_ref[...] = jnp.zeros_like(out_ref)

    x = x_ref[...].astype(jnp.float32)
    y = y_ref[...].astype(jnp.float32)

    # One transcendental exp shared between softplus and sigmoid.
    e = jnp.exp(-jnp.abs(x))                                  # exp(-|x|) in (0, 1]
    softplus_neg_x = jnp.maximum(-x, 0.0) + jnp.log1p(e)      # stable softplus(-x)
    # BCEWithLogits with pos_weight: (1-y)*x + (1 + (pw-1)*y) * softplus(-x)
    bce = (1.0 - y) * x + (1.0 + (pos_weight - 1.0) * y) * softplus_neg_x
    inv = 1.0 / (1.0 + e)
    p = jnp.where(x >= 0.0, inv, e * inv)                     # sigmoid(x), no 2nd exp

    tile_r = x.shape[0]

    def vsum(v):  # (tile_r, 128) -> (8, 128): elementwise vreg adds (VPU only)
        return v.reshape(tile_r // 8, 8, _LANES).sum(axis=0)

    upd = jnp.concatenate([vsum(bce), vsum(p * y), vsum(p), vsum(y)], axis=-1)
    out_ref[0] += upd


def _round_up(n, m):
    return ((n + m - 1) // m) * m


def bce_dice_loss(x, y, *, pos_weight=5.0, smooth=1.0, alpha=1.0, beta=1.0,
                  tile_rows=1024, num_splits=2):
    """x: logits, y: targets (same shape, any float dtype). Returns scalar loss."""
    assert x.shape == y.shape
    total = x.size
    rows = pl.cdiv(total, _LANES)

    tile_r = min(int(tile_rows), _round_up(rows, 8))
    tiles_per_split = pl.cdiv(rows, tile_r * num_splits)
    rows_padded = num_splits * tiles_per_split * tile_r
    pad = rows_padded * _LANES - total

    # Neutral padding: x=-60 -> BCE contribution == 0 exactly, sigmoid ~ 8.8e-27.
    xf = jnp.pad(jnp.ravel(x), (0, pad), constant_values=-60.0)
    yf = jnp.pad(jnp.ravel(y), (0, pad), constant_values=0)
    xf = xf.reshape(rows_padded, _LANES)
    yf = yf.reshape(rows_padded, _LANES)

    kernel = functools.partial(_bce_dice_partial_kernel,
                               pos_weight=float(pos_weight))
    idx = lambda c, t: (c * tiles_per_split + t, 0)

    partials = pl.pallas_call(
        kernel,
        out_shape=jax.ShapeDtypeStruct((num_splits, 8, 4 * _LANES), jnp.float32),
        grid_spec=pltpu.PrefetchScalarGridSpec(
            num_scalar_prefetch=0,
            grid=(num_splits, tiles_per_split),
            in_specs=[
                pl.BlockSpec((tile_r, _LANES), idx),
                pl.BlockSpec((tile_r, _LANES), idx),
            ],
            out_specs=pl.BlockSpec((1, 8, 4 * _LANES), lambda c, t: (c, 0, 0)),
        ),
        compiler_params=pltpu.CompilerParams(
            dimension_semantics=("parallel", "arbitrary"),
            vmem_limit_bytes=32 * 1024 * 1024,
        ),
    )(xf, yf)

    # Final combine on 4 * 2 * 8 * 128 partial sums (tiny) in plain JAX.
    sums = partials.reshape(num_splits, 8, 4, _LANES).sum(axis=(0, 1, 3))
    bce_mean = sums[0] / jnp.float32(total)
    dice = 1.0 - (2.0 * sums[1] + smooth) / (sums[2] + sums[3] + smooth)
    return alpha * bce_mean + beta * dice


def _reference(x, y, pos_weight=5.0, smooth=1.0):
    x = x.astype(jnp.float32)
    y = y.astype(jnp.float32)
    sp = jnp.maximum(-x, 0.0) + jnp.log1p(jnp.exp(-jnp.abs(x)))
    bce = jnp.mean((1.0 - y) * x + (1.0 + (pos_weight - 1.0) * y) * sp)
    p = jax.nn.sigmoid(x)
    dice = 1.0 - (2.0 * jnp.sum(p * y) + smooth) / (jnp.sum(p) + jnp.sum(y) + smooth)
    return bce + dice


if __name__ == "__main__":
    key = jax.random.PRNGKey(0)
    kx, ky = jax.random.split(key)
    # NCHW logits / binary targets: batch=2, channels=4, spatial=16x16
    x = jax.random.normal(kx, (2, 4, 16, 16), dtype=jnp.float32)
    y = (jax.random.uniform(ky, (2, 4, 16, 16)) > 0.5).astype(jnp.float32)

    loss = jax.block_until_ready(bce_dice_loss(x, y))
    ref = jax.block_until_ready(_reference(x, y))
    assert jnp.allclose(loss, ref, rtol=2e-5, atol=2e-5), (loss, ref)
    print("KERNEL_OK")
</pallas_src>

<mosaic_0001>
module attributes {stable_mosaic.version = 11 : i64} {
  func.func @_bce_dice_partial_kernel(%arg0: i32, %arg1: i32, %arg2: memref<16x128xf32, #tpu.memory_space<vmem>>, %arg3: memref<16x128xf32, #tpu.memory_space<vmem>>, %arg4: memref<1x8x512xf32, #tpu.memory_space<vmem>>) attributes {dimension_semantics = [#tpu.dimension_semantics<parallel>, #tpu.dimension_semantics<arbitrary>], iteration_bounds = array<i64: 2, 1>, scalar_prefetch = 0 : i64, scratch_operands = 0 : i64, tpu.core_type = #tpu.core_type<tc>, window_params = [{transform_indices = @transform_0, window_bounds = array<i64: 16, 128>}, {transform_indices = @transform_1, window_bounds = array<i64: 16, 128>}, {transform_indices = @transform_2, window_bounds = array<i64: 1, 8, 512>}]} {
    %c0_i32 = arith.constant 0 : i32
    %0 = arith.cmpi eq, %arg1, %c0_i32 : i32
    %1 = arith.extui %0 : i1 to i32
    %c0_i32_0 = arith.constant 0 : i32
    %2 = arith.cmpi ne, %1, %c0_i32_0 : i32
    scf.if %2 {
      %cst_22 = arith.constant 0.000000e+00 : f32
      %48 = vector.broadcast %cst_22 : f32 to vector<1x8x512xf32>
      %c0_23 = arith.constant 0 : index
      %c0_24 = arith.constant 0 : index
      %c0_25 = arith.constant 0 : index
      %49 = vector.load %arg4[%c0_23, %c0_24, %c0_25] : memref<1x8x512xf32, #tpu.memory_space<vmem>>, vector<1x8x512xf32>
      tpu.vector_store %arg4[%c0_23, %c0_24, %c0_25], %48 {strides = array<i32>} : memref<1x8x512xf32, #tpu.memory_space<vmem>>, vector<1x8x512xf32>,
    } else {
    }
    %c0 = arith.constant 0 : index
    %c0_1 = arith.constant 0 : index
    %3 = vector.load %arg2[%c0, %c0_1] : memref<16x128xf32, #tpu.memory_space<vmem>>, vector<16x128xf32>
    %c0_2 = arith.constant 0 : index
    %c0_3 = arith.constant 0 : index
    %4 = vector.load %arg3[%c0_2, %c0_3] : memref<16x128xf32, #tpu.memory_space<vmem>>, vector<16x128xf32>
    %5 = math.absf %3 : vector<16x128xf32>
    %cst = arith.constant 0.000000e+00 : f32
    %6 = vector.broadcast %cst : f32 to vector<16x128xf32>
    %7 = arith.subf %6, %5 : vector<16x128xf32>
    %8 = math.exp %7 : vector<16x128xf32>
    %cst_4 = arith.constant 0.000000e+00 : f32
    %9 = vector.broadcast %cst_4 : f32 to vector<16x128xf32>
    %10 = arith.subf %9, %3 : vector<16x128xf32>
    %cst_5 = arith.constant 0.000000e+00 : f32
    %11 = vector.broadcast %cst_5 : f32 to vector<16x128xf32>
    %12 = arith.maximumf %10, %11 : vector<16x128xf32>
    %13 = math.log1p %8 : vector<16x128xf32>
    %14 = arith.addf %12, %13 : vector<16x128xf32>
    %cst_6 = arith.constant 1.000000e+00 : f32
    %15 = vector.broadcast %cst_6 : f32 to vector<16x128xf32>
    %16 = arith.subf %15, %4 : vector<16x128xf32>
    %17 = arith.mulf %16, %3 : vector<16x128xf32>
    %cst_7 = arith.constant 4.000000e+00 : f32
    %18 = vector.broadcast %cst_7 : f32 to vector<16x128xf32>
    %19 = arith.mulf %18, %4 : vector<16x128xf32>
    %cst_8 = arith.constant 1.000000e+00 : f32
    %20 = vector.broadcast %cst_8 : f32 to vector<16x128xf32>
    %21 = arith.addf %20, %19 : vector<16x128xf32>
    %22 = arith.mulf %21, %14 : vector<16x128xf32>
    %23 = arith.addf %17, %22 : vector<16x128xf32>
    %cst_9 = arith.constant 1.000000e+00 : f32
    %24 = vector.broadcast %cst_9 : f32 to vector<16x128xf32>
    %25 = arith.addf %24, %8 : vector<16x128xf32>
    %cst_10 = arith.constant 1.000000e+00 : f32
    %26 = vector.broadcast %cst_10 : f32 to vector<16x128xf32>
    %27 = arith.divf %26, %25 : vector<16x128xf32>
    %cst_11 = arith.constant 0.000000e+00 : f32
    %28 = vector.broadcast %cst_11 : f32 to vector<16x128xf32>
    %29 = arith.cmpf oge, %3, %28 : vector<16x128xf32>
    %30 = arith.mulf %8, %27 : vector<16x128xf32>
    %31 = arith.select %29, %27, %30 : vector<16x128xi1>, vector<16x128xf32>
    %32 = vector.shape_cast %23 : vector<16x128xf32> to vector<2x8x128xf32>
    %cst_12 = arith.constant dense<0.000000e+00> : vector<8x128xf32>
    %33 = vector.multi_reduction <add>, %32, %cst_12 [0] : vector<2x8x128xf32> to vector<8x128xf32>
    %34 = arith.mulf %31, %4 : vector<16x128xf32>
    %35 = vector.shape_cast %34 : vector<16x128xf32> to vector<2x8x128xf32>
    %cst_13 = arith.constant dense<0.000000e+00> : vector<8x128xf32>
    %36 = vector.multi_reduction <add>, %35, %cst_13 [0] : vector<2x8x128xf32> to vector<8x128xf32>
    %37 = vector.shape_cast %31 : vector<16x128xf32> to vector<2x8x128xf32>
    %cst_14 = arith.constant dense<0.000000e+00> : vector<8x128xf32>
    %38 = vector.multi_reduction <add>, %37, %cst_14 [0] : vector<2x8x128xf32> to vector<8x128xf32>
    %39 = vector.shape_cast %4 : vector<16x128xf32> to vector<2x8x128xf32>
    %cst_15 = arith.constant dense<0.000000e+00> : vector<8x128xf32>
    %40 = vector.multi_reduction <add>, %39, %cst_15 [0] : vector<2x8x128xf32> to vector<8x128xf32>
    %41 = tpu.concatenate %33, %36, %38, %40 in 1 : vector<8x128xf32>, vector<8x128xf32>, vector<8x128xf32>, vector<8x128xf32> -> vector<8x512xf32>
    %c0_16 = arith.constant 0 : index
    %c0_17 = arith.constant 0 : index
    %c0_18 = arith.constant 0 : index
    %42 = vector.load %arg4[%c0_16, %c0_17, %c0_18] : memref<1x8x512xf32, #tpu.memory_space<vmem>>, vector<1x8x512xf32>
    %43 = vector.shape_cast %42 : vector<1x8x512xf32> to vector<8x512xf32>
    %44 = arith.addf %43, %41 : vector<8x512xf32>
    %c0_19 = arith.constant 0 : index
    %c0_20 = arith.constant 0 : index
    %c0_21 = arith.constant 0 : index
    %45 = vector.load %arg4[%c0_19, %c0_20, %c0_21] : memref<1x8x512xf32, #tpu.memory_space<vmem>>, vector<1x8x512xf32>
    %46 = vector.shape_cast %45 : vector<1x8x512xf32> to vector<8x512xf32>
    %47 = vector.shape_cast %44 : vector<8x512xf32> to vector<1x8x512xf32>
    tpu.vector_store %arg4[%c0_19, %c0_20, %c0_21], %47 {strides = array<i32>} : memref<1x8x512xf32, #tpu.memory_space<vmem>>, vector<1x8x512xf32>,
    return
  }
  func.func @transform_0(%arg0: i32, %arg1: i32) -> (i32, i32) {
    %c1_i32 = arith.constant 1 : i32
    %0 = arith.muli %arg0, %c1_i32 : i32
    %1 = arith.addi %0, %arg1 : i32
    %c0_i32 = arith.constant 0 : i32
    %c0_i32_0 = arith.constant 0 : i32
    return %1, %c0_i32 : i32, i32
  }
  func.func @transform_1(%arg0: i32, %arg1: i32) -> (i32, i32) {
    %c1_i32 = arith.constant 1 : i32
    %0 = arith.muli %arg0, %c1_i32 : i32
    %1 = arith.addi %0, %arg1 : i32
    %c0_i32 = arith.constant 0 : i32
    %c0_i32_0 = arith.constant 0 : i32
    return %1, %c0_i32 : i32, i32
  }
  func.func @transform_2(%arg0: i32, %arg1: i32) -> (i32, i32, i32) {
    %c0_i32 = arith.constant 0 : i32
    %c0_i32_0 = arith.constant 0 : i32
    %c0_i32_1 = arith.constant 0 : i32
    return %arg0, %c0_i32, %c0_i32_0 : i32, i32, i32
  }
}

</mosaic_0001>

<llo_original>
// kernel: tpu_custom_call.1
$region0: #{tpu_custom_call.1}
  #allocation0 [shape = 'u32[]', space=smem, size = 0x4, offset = 0x4, fixed_abs, tag = 'smem constant byte address 0x4 - core index']
  #allocation1 [shape = 'u32[144,128]{1,0:T(1,128)}', space=vmem, size = 0x12000, scoped, tag = 'internal scratch']
  %s0 = inlined_call_operand.hbm [shape: f32[32,128], index: 0, kind: input, shape index: {}]
  %s1 = inlined_call_operand.hbm [shape: f32[32,128], index: 1, kind: input, shape index: {}]
  %s2 = inlined_call_operand.hbm [shape: f32[2,8,512], index: 2, kind: output, shape index: {}]
  %s3 = sld [smem:[#allocation0]]
  $region53: #{tpu_custom_call.1} parent=0
    _
  %s5 = ssub.s32 1, %s3
  %s6 = scalar_select 0, %s5, %s3
  $region1: #{tpu_custom_call.1} parent=0
    #allocation2 [shape = 'u8[16384]{0}', space=vmem, size = 0x4000, scoped, tag = 'input window, operand 0']
    #allocation3 [shape = 's32[2]{0}', space=sflag, size = 0x8, scoped, tag = 'scoped memory for tpu_custom_call.1']
    #allocation4 [shape = 's32[2]{0}', space=sflag, size = 0x8, scoped, tag = 'scoped memory for tpu_custom_call.1']
    #allocation5 [shape = 'u8[16384]{0}', space=vmem, size = 0x4000, scoped, tag = 'input window, operand 1']
    #allocation6 [shape = 's32[2]{0}', space=sflag, size = 0x8, scoped, tag = 'scoped memory for tpu_custom_call.1']
    #allocation7 [shape = 'u8[32768]{0}', space=vmem, size = 0x8000, scoped, tag = 'output window, operand 0']
    %7 = vsyncpa [#allocation3], 0
    %s8 = scalar_lea.sflag [#allocation3], 1
    %9 = vsyncpa %s8, 0
    %10 = vsyncpa [#allocation6], 0
    %s11 = scalar_lea.sflag [#allocation6], 1
    %12 = vsyncpa %s11, 0
    %13 = vsyncpa [#allocation4], 0
    %s14 = scalar_lea.sflag [#allocation4], 1
    %15 = vsyncpa %s14, 0
    loop: start=0, step=1, limit=4
    $region2: #{tpu_custom_call.1} parent=1 // loop_pre_header
      _
    $region3: #{tpu_custom_call.1} parent=1 // loop_header
      %s17 = sphi 0, %s21
      %p18 = scmp.ge.s32.totalorder %s17, 4
      %s24 = sphi 0, %s36
      %s25 = sphi 0, %s32
      %s26 = sphi 0, %s24
      %s27 = sphi 0, %s25
      %s28 = sphi 0, %s26
      %s29 = sphi 0, %s27
      %s41 = sphi 0, %s43
      %s44 = sphi 0, %s41
      %s45 = sphi 0, %s44
      %s61 = sphi 0, %s45
      %s69 = sphi 0, %s71
      %s72 = sphi 0, %s69
      %s73 = sphi 0, %s72
      %s89 = sphi 0, %s73
      %s95 = sphi 0, %s97
      %s98 = sphi 0, %s95
      %s99 = sphi 0, %s98
      %s115 = sphi 0, %s99
    $region4: #{tpu_custom_call.1} parent=1 // loop_header_branch
      %20 = sbr.rel (%p18) target = $region8
    $region5: #{tpu_custom_call.1} parent=1 // loop_body
      %s22 = ssub.s32 %s17, 1
      %s23 = ssub.s32 %s17, 2
      %s30 = sadd.s32 1, %s25
      %p31 = scmp.ge.s32.totalorder %s30, 1
      %s32 = scalar_select %p31, 0, %s30
      %s33 = sadd.s32 1, %s24
      %s34 = scalar_select %p31, %s33, %s24
      %p35 = scmp.ge.s32.totalorder %s34, 2
      %s36 = scalar_select %p35, 0, %s34
      %s37 = sadd.s32 %s24, %s25
      %s38 = sadd.s32 %s36, %s32
      %s39 = ssub.s32 %s37, %s38
      %p40 = scmp.eq.s32.totalorder %s39, 0
      %s42 = sadd.s32 %s41, 1
      %s43 = scalar_select %p40, %s41, %s42
      %p46 = pneg %p40
      %p47 = scmp.eq.s32.totalorder %s17, 1
      %p48 = por %p46, %p47
      %p49 = scmp.ne.s32.totalorder %s41, %s44
      %p50 = scmp.eq.s32.totalorder %s17, 0
      %p51 = por %p49, %p50
      %p52 = scmp.ne.s32.totalorder %s41, %s44
      %p53 = scmp.eq.s32.totalorder %s22, 1
      %p54 = por %p52, %p53
      %p55 = scmp.ne.s32.totalorder %s44, %s45
      %p56 = scmp.eq.s32.totalorder %s22, 0
      %p57 = por %p55, %p56
      %p58 = scmp.ne.s32.totalorder %s44, %s45
      %p59 = scmp.eq.s32.totalorder %s23, 1
      %p60 = por %p58, %p59
      %p62 = scmp.ne.s32.totalorder %s45, %s61
      %p63 = scmp.eq.s32.totalorder %s23, 0
      %p64 = por %p62, %p63
      %s65 = sadd.s32 %s24, %s25
      %s66 = sadd.s32 %s36, %s32
      %s67 = ssub.s32 %s65, %s66
      %p68 = scmp.eq.s32.totalorder %s67, 0
      %s70 = sadd.s32 %s69, 1
      %s71 = scalar_select %p68, %s69, %s70
      %p74 = pneg %p68
      %p75 = scmp.eq.s32.totalorder %s17, 1
      %p76 = por %p74, %p75
      %p77 = scmp.ne.s32.totalorder %s69, %s72
      %p78 = scmp.eq.s32.totalorder %s17, 0
      %p79 = por %p77, %p78
      %p80 = scmp.ne.s32.totalorder %s69, %s72
      %p81 = scmp.eq.s32.totalorder %s22, 1
      %p82 = por %p80, %p81
      %p83 = scmp.ne.s32.totalorder %s72, %s73
      %p84 = scmp.eq.s32.totalorder %s22, 0
      %p85 = por %p83, %p84
      %p86 = scmp.ne.s32.totalorder %s72, %s73
      %p87 = scmp.eq.s32.totalorder %s23, 1
      %p88 = por %p86, %p87
      %p90 = scmp.ne.s32.totalorder %s73, %s89
      %p91 = scmp.eq.s32.totalorder %s23, 0
      %p92 = por %p90, %p91
      %s93 = ssub.s32 %s24, %s36
      %p94 = scmp.eq.s32.totalorder %s93, 0
      %s96 = sadd.s32 %s95, 1
      %s97 = scalar_select %p94, %s95, %s96
      %p100 = pneg %p94
      %p101 = scmp.eq.s32.totalorder %s17, 1
      %p102 = por %p100, %p101
      %p103 = scmp.ne.s32.totalorder %s95, %s98
      %p104 = scmp.eq.s32.totalorder %s17, 0
      %p105 = por %p103, %p104
      %p106 = scmp.ne.s32.totalorder %s95, %s98
      %p107 = scmp.eq.s32.totalorder %s22, 1
      %p108 = por %p106, %p107
      %p109 = scmp.ne.s32.totalorder %s98, %s99
      %p110 = scmp.eq.s32.totalorder %s22, 0
      %p111 = por %p109, %p110
      %p112 = scmp.ne.s32.totalorder %s98, %s99
      %p113 = scmp.eq.s32.totalorder %s23, 1
      %p114 = por %p112, %p113
      %p116 = scmp.ne.s32.totalorder %s99, %s115
      %p117 = scmp.eq.s32.totalorder %s23, 0
      %p118 = por %p116, %p117
      %p119 = scmp.le.s32.totalorder 1, %s17
      %p120 = scmp.lt.s32.totalorder %s17, 3
      %p121 = pnand %p119, %p120
      %p122 = pneg %p121
      // Predicated region
      $region9: #{tpu_custom_call.1} parent=5 // pred_check
        _
      $region10: #{tpu_custom_call.1} parent=5 // pred_check_branch
        %124 = sbr.rel (%p121) target = $region12
      $region11: #{tpu_custom_call.1} parent=5 // pred_region
        %s125 = ssub.s32 %s17, 1
      $region12: #{tpu_custom_call.1} parent=5 // pred_fallthru
        _
      %p126 = scmp.lt.s32.totalorder %s17, 2
      // Predicated region
      $region13: #{tpu_custom_call.1} parent=5 // pred_check
        %p127 = pneg %p126
      $region14: #{tpu_custom_call.1} parent=5 // pred_check_branch
        %129 = sbr.rel (%p127) target = $region16
      $region15: #{tpu_custom_call.1} parent=5 // pred_region
        // Predicated region
        $region17: #{tpu_custom_call.1} parent=15 // pred_check
          %p130 = pneg %p51
        $region18: #{tpu_custom_call.1} parent=15 // pred_check_branch
          %132 = sbr.rel (%p130) target = $region20
        $region19: #{tpu_custom_call.1} parent=15 // pred_region
          %s133 = sand.u32 %s41, 1
          %s134 = scalar_lea.sflag [#allocation3], %s133
          %s135 = sand.u32 %s41, 1
          %s136 = smul.addr %s135, 16
          %s137 = scalar_lea.vmem [#allocation2], %s136
          %s138 = sadd.s32 %s24, %s25
          %s139 = smul.u32 2, %s138
          %s141 = ssub.s32 256, 256
          %142 = vsyncadd %s134, %s141
          %s143 = smul.addr %s139, 128
          %s144 = scalar_lea.hbm %s0, %s143
          %s145 = sshll.u32 %s137, 4
          %s146 = int_to_ptr.vmem [resolvable:$true] %s145
          %151 = dma.hbm_to_vmem [thread:$0]  %s144, 256, %s146, %s134, 128, 128, 8
        $region20: #{tpu_custom_call.1} parent=15 // pred_fallthru
          _
        // Predicated region
        $region21: #{tpu_custom_call.1} parent=15 // pred_check
          %p152 = pneg %p79
        $region22: #{tpu_custom_call.1} parent=15 // pred_check_branch
          %154 = sbr.rel (%p152) target = $region24
        $region23: #{tpu_custom_call.1} parent=15 // pred_region
          %s155 = sand.u32 %s69, 1
          %s156 = scalar_lea.sflag [#allocation6], %s155
          %s157 = sand.u32 %s69, 1
          %s158 = smul.addr %s157, 16
          %s159 = scalar_lea.vmem [#allocation5], %s158
          %s160 = sadd.s32 %s24, %s25
          %s161 = smul.u32 2, %s160
          %s163 = ssub.s32 256, 256
          %164 = vsyncadd %s156, %s163
          %s165 = smul.addr %s161, 128
          %s166 = scalar_lea.hbm %s1, %s165
          %s167 = sshll.u32 %s159, 4
          %s168 = int_to_ptr.vmem [resolvable:$true] %s167
          %173 = dma.hbm_to_vmem [thread:$0]  %s166, 256, %s168, %s156, 128, 128, 8
        $region24: #{tpu_custom_call.1} parent=15 // pred_fallthru
          _
      $region16: #{tpu_custom_call.1} parent=5 // pred_fallthru
        _
      %p174 = scmp.le.s32.totalorder 1, %s17
      %p175 = scmp.lt.s32.totalorder %s17, 3
      %p176 = pnand %p174, %p175
      %p177 = pneg %p176
      // Predicated region
      $region25: #{tpu_custom_call.1} parent=5 // pred_check
        _
      $region26: #{tpu_custom_call.1} parent=5 // pred_check_branch
        %179 = sbr.rel (%p176) target = $region28
      $region27: #{tpu_custom_call.1} parent=5 // pred_region
        %s180 = ssub.s32 %s17, 1
        %s181 = sand.u32 %s44, 1
        %s182 = scalar_lea.sflag [#allocation3], %s181
        %s183 = sand.u32 %s44, 1
        %s184 = smul.addr %s183, 16
        %s185 = scalar_lea.vmem [#allocation2], %s184
        // Predicated region
        $region29: #{tpu_custom_call.1} parent=27 // pred_check
          %p186 = pneg %p57
        $region30: #{tpu_custom_call.1} parent=27 // pred_check_branch
          %188 = sbr.rel (%p186) target = $region32
        $region31: #{tpu_custom_call.1} parent=27 // pred_region
          %189 = dma.done %s182, 256
        $region32: #{tpu_custom_call.1} parent=27 // pred_fallthru
          _
        %s190 = sand.u32 %s72, 1
        %s191 = scalar_lea.sflag [#allocation6], %s190
        %s192 = sand.u32 %s72, 1
        %s193 = smul.addr %s192, 16
        %s194 = scalar_lea.vmem [#allocation5], %s193
        // Predicated region
        $region33: #{tpu_custom_call.1} parent=27 // pred_check
          %p195 = pneg %p85
        $region34: #{tpu_custom_call.1} parent=27 // pred_check_branch
          %197 = sbr.rel (%p195) target = $region36
        $region35: #{tpu_custom_call.1} parent=27 // pred_region
          %198 = dma.done %s191, 256
        $region36: #{tpu_custom_call.1} parent=27 // pred_fallthru
          _
        %s199 = sand.u32 %s44, 1
        %s200 = scalar_lea.sflag [#allocation3], %s199
        %s201 = sand.u32 %s44, 1
        %s202 = smul.addr %s201, 16
        %s203 = scalar_lea.vmem [#allocation2], %s202
        %p204 = pneg %p57
        %p205 = pneg %p54
        %s206 = sand.u32 %s72, 1
        %s207 = scalar_lea.sflag [#allocation6], %s206
        %s208 = sand.u32 %s72, 1
        %s209 = smul.addr %s208, 16
        %s210 = scalar_lea.vmem [#allocation5], %s209
        %p211 = pneg %p85
        %p212 = pneg %p82
        %p213 = pneg %p111
        %p214 = pneg %p108
        %s215 = sand.u32 %s98, 1
        %s216 = scalar_lea.sflag [#allocation4], %s215
        %s217 = sand.u32 %s98, 1
        %s218 = smul.addr %s217, 32
        %s219 = scalar_lea.vmem [#allocation7], %s218
        %s220 = sadd.s32 %s26, %s27
        %s221 = smul.u32 2, %s220
        %s222 = sadd.s32 %s26, %s27
        %s223 = smul.u32 2, %s222
        %p224 = scmp.eq.s32.totalorder %s27, 0
        // Predicated region
        $region37: #{tpu_custom_call.1} parent=27 // pred_check
          %p225 = pneg %p224
        $region38: #{tpu_custom_call.1} parent=27 // pred_check_branch
          %227 = sbr.rel (%p225) target = $region40
        $region39: #{tpu_custom_call.1} parent=27 // pred_region
          %228 = vst [vmem:[%s219] sm:$0xff] 0.0
          %229 = vst [vmem:[%s219 + $0x8] sm:$0xff] 0.0
          %230 = vst [vmem:[%s219 + $0x10] sm:$0xff] 0.0
          %231 = vst [vmem:[%s219 + $0x18] sm:$0xff] 0.0
        $region40: #{tpu_custom_call.1} parent=27 // pred_fallthru
          _
        %v232 = vld [vmem:[%s185] sm:$0xff]
        %v233 = vld [vmem:[%s185 + $0x8] sm:$0xff]
        %v234 = vld [vmem:[%s194] sm:$0xff]
        %v235 = vld [vmem:[%s194 + $0x8] sm:$0xff]
        %v236 = vand.u32 2147483647, %v232
        %v237 = vand.u32 2147483647, %v233
        %v238 = vsub.f32 0.0, %v236
        %v239 = vsub.f32 0.0, %v237
        %v240 = vmul.f32 %v238, 1.442695
        %v241 = vpow.pop %v240
        %v242 = vmul.f32 %v239, 1.442695
        %v243 = vpow.pop %v242
        %v244 = vsub.f32 0.0, %v232
        %v245 = vsub.f32 0.0, %v233
        %v246 = vmax.f32 %v244, 0.0
        %v247 = vmax.f32 %v245, 0.0
        %v248 = vadd.f32 %v241, 1.0
        %v249 = vlog2.pop %v248
        %v250 = vmul.f32 %v249, 0.6931472
        %v251 = vmul.f32 -0.5, %v241
        %v252 = vadd.f32 %v251, 1.0
        %v253 = vmul.f32 %v252, %v241
        %v254 = vand.u32 2147483647, %v241
        %vm255 = vcmp.lt.f32.partialorder %v254, 0.0004427343
        %v256 = vsel %vm255, %v253, %v250
        %v257 = vadd.f32 %v243, 1.0
        %v258 = vlog2.pop %v257
        %v259 = vmul.f32 %v258, 0.6931472
        %v260 = vmul.f32 -0.5, %v243
        %v261 = vadd.f32 %v260, 1.0
        %v262 = vmul.f32 %v261, %v243
        %v263 = vand.u32 2147483647, %v243
        %vm264 = vcmp.lt.f32.partialorder %v263, 0.0004427343
        %v265 = vsel %vm264, %v262, %v259
        %v266 = vadd.f32 %v246, %v256
        %v267 = vadd.f32 %v247, %v265
        %v268 = vsub.f32 1.0, %v234
        %v269 = vsub.f32 1.0, %v235
        %v270 = vmul.f32 %v268, %v232
        %v271 = vmul.f32 %v269, %v233
        %v272 = vmul.f32 %v234, 4.0
        %v273 = vmul.f32 %v235, 4.0
        %v274 = vadd.f32 %v272, 1.0
        %v275 = vadd.f32 %v273, 1.0
        %v276 = vmul.f32 %v274, %v266
        %v277 = vmul.f32 %v275, %v267
        %v278 = vadd.f32 %v270, %v276
        %v279 = vadd.f32 %v271, %v277
        %v280 = vadd.f32 %v241, 1.0
        %v281 = vadd.f32 %v243, 1.0
        %v282 = vrcp.pop %v280
        %v283 = vmul.f32 1.0, %v282
        %v284 = vrcp.pop %v281
        %v285 = vmul.f32 1.0, %v284
        %vm286 = vcmp.ge.f32.partialorder %v232, 0.0
        %vm287 = vcmp.ge.f32.partialorder %v233, 0.0
        %v288 = vmul.f32 %v241, %v283
        %v289 = vmul.f32 %v243, %v285
        %v290 = vsel %vm286, %v283, %v288
        %v291 = vsel %vm287, %v285, %v289
        %v292 = vadd.f32 %v278, %v279
        %v293 = vmul.f32 %v290, %v234
        %v294 = vmul.f32 %v291, %v235
        %v295 = vadd.f32 %v293, %v294
        %v296 = vadd.f32 %v290, %v291
        %v297 = vadd.f32 %v234, %v235
        %v298 = vld [vmem:[%s219] sm:$0xff]
        %v299 = vld [vmem:[%s219 + $0x8] sm:$0xff]
        %v300 = vld [vmem:[%s219 + $0x10] sm:$0xff]
        %v301 = vld [vmem:[%s219 + $0x18] sm:$0xff]
        %v302 = vadd.f32 %v298, %v292
        %v303 = vadd.f32 %v299, %v295
        %v304 = vadd.f32 %v300, %v296
        %v305 = vadd.f32 %v301, %v297
        %306 = vst [vmem:[%s219] sm:$0xff] %v302
        %307 = vst [vmem:[%s219 + $0x8] sm:$0xff] %v303
        %308 = vst [vmem:[%s219 + $0x10] sm:$0xff] %v304
        %309 = vst [vmem:[%s219 + $0x18] sm:$0xff] %v305
        %s310 = sand.u32 %s98, 1
        %s311 = scalar_lea.sflag [#allocation4], %s310
        %s312 = sand.u32 %s98, 1
        %s313 = smul.addr %s312, 32
        %s314 = scalar_lea.vmem [#allocation7], %s313
        // Predicated region
        $region41: #{tpu_custom_call.1} parent=27 // pred_check
          %p315 = pneg %p108
        $region42: #{tpu_custom_call.1} parent=27 // pred_check_branch
          %317 = sbr.rel (%p315) target = $region44
        $region43: #{tpu_custom_call.1} parent=27 // pred_region
          %s319 = ssub.s32 512, 512
          %320 = vsyncadd %s311, %s319
          %s321 = smul.addr %s26, 4
          %s322 = smul.addr %s321, 128
          %s323 = scalar_lea.hbm %s2, %s322
          %s325 = sshll.u32 %s314, 4
          %s326 = int_to_ptr.vmem [resolvable:$true] %s325
          %328 = dma.vmem_to_hbm [thread:$0]  %s326, 512, %s323, %s311
        $region44: #{tpu_custom_call.1} parent=27 // pred_fallthru
          _
      $region28: #{tpu_custom_call.1} parent=5 // pred_fallthru
        _
      %p329 = scmp.le.s32.totalorder 2, %s17
      // Predicated region
      $region45: #{tpu_custom_call.1} parent=5 // pred_check
        %p330 = pneg %p329
      $region46: #{tpu_custom_call.1} parent=5 // pred_check_branch
        %332 = sbr.rel (%p330) target = $region48
      $region47: #{tpu_custom_call.1} parent=5 // pred_region
        %s333 = ssub.s32 %s17, 2
        // Predicated region
        $region49: #{tpu_custom_call.1} parent=47 // pred_check
          %p334 = pneg %p114
        $region50: #{tpu_custom_call.1} parent=47 // pred_check_branch
          %336 = sbr.rel (%p334) target = $region52
        $region51: #{tpu_custom_call.1} parent=47 // pred_region
          %s337 = sand.u32 %s99, 1
          %s338 = scalar_lea.sflag [#allocation4], %s337
          %s339 = sand.u32 %s99, 1
          %s340 = smul.addr %s339, 32
          %s341 = scalar_lea.vmem [#allocation7], %s340
          %342 = dma.done %s338, 512
        $region52: #{tpu_custom_call.1} parent=47 // pred_fallthru
          _
      $region48: #{tpu_custom_call.1} parent=5 // pred_fallthru
        _
    $region6: #{tpu_custom_call.1} parent=1 // loop_footer
      %s21 = sadd.s32 1, %s17
    $region7: #{tpu_custom_call.1} parent=1 // loop_footer_branch
      %16 = sbr.rel target = $region3
    $region8: #{tpu_custom_call.1} parent=1 // loop_exit
      _
    %343 = vsyncpa [#allocation3], 1
    %s344 = scalar_lea.sflag [#allocation3], 1
    %345 = vsyncpa %s344, 1
    %346 = vsyncpa [#allocation6], 1
    %s347 = scalar_lea.sflag [#allocation6], 1
    %348 = vsyncpa %s347, 1
    %349 = vsyncpa [#allocation4], 1
    %s350 = scalar_lea.sflag [#allocation4], 1
    %351 = vsyncpa %s350, 1

</llo_original>
